<compile_context>
chip_gen: v7x
topology: tpu7x:2x2x1
jax: 0.10.0
libtpu: 0.0.40
codegen_flags: <defaults>
</compile_context>

<pallas_src>
import jax
import jax.numpy as jnp
from jax.experimental import pallas as pl
from jax.experimental.pallas import tpu as pltpu


def _round_up(x, m):
    return (x + m - 1) // m * m


_HAS_BUFFERED = hasattr(pl, "Buffered")


def _resident_spec(shape):
    """BlockSpec for a weight that never changes across the grid (single-buffered)."""
    if _HAS_BUFFERED:
        return pl.BlockSpec(shape, lambda i: (0,) * len(shape),
                            pipeline_mode=pl.Buffered(1))
    return pl.BlockSpec(shape, lambda i: (0,) * len(shape))


def _make_fnfm_kernel(num_layers):
    """Ref order:
       cross (TB, ffm_pad) bf16, lin (1, 1, TB) f32,
       [W_l (in_pad, h_pad) bf16, b_l (1, h_pad) f32] * num_layers   (BN pre-folded),
       w_out (1, h_last_pad) f32,
       out (1, 1, TB) f32
    """

    def kernel(*refs):
        idx = 0
        h = refs[idx][...]; idx += 1                       # (TB, ffm_pad) bf16
        lin = refs[idx][...].reshape(1, -1); idx += 1      # (1, TB) f32

        for _ in range(num_layers):
            w = refs[idx][...]                             # (in_pad, h_pad) bf16
            b = refs[idx + 1][...]                         # (1, h_pad)      f32
            idx += 2
            acc = jnp.dot(h, w, preferred_element_type=jnp.float32) + b
            h = jnp.maximum(acc, 0.0).astype(jnp.bfloat16)  # ReLU; Dropout = identity

        w_out = refs[idx][...]                             # (1, h_last_pad) f32
        out_ref = refs[idx + 1]                            # (1, 1, TB)

        # Final width-1 FC as VPU multiply + lane reduction (avoids an N=1 MXU dot),
        # then relayout (TB, 1) -> (1, TB) so the store is lane-dense.
        logit = jnp.sum(h.astype(jnp.float32) * w_out, axis=-1, keepdims=True)  # (TB, 1)
        logit = logit.reshape(1, -1) + lin                                       # (1, TB)
        out_ref[...] = jax.nn.sigmoid(logit).reshape(1, 1, -1)

    return kernel


def fnfm_forward(x, params, *, eps=1e-5, batch_tile=512):
    """FNFM forward. `x` is int32 (B, num_fields). Returns (B,) probabilities (f32)."""
    offsets = params["offsets"]               # (F,)
    ffm_tables = params["ffm_embeddings"]     # (F, N, D)
    lin_w = params["linear_w"]                # (N, 1)
    lin_b = params["linear_b"]                # (1, 1)

    B, F = x.shape
    D = ffm_tables.shape[-1]
    P = F * (F - 1) // 2
    ffm_dim = P * D
    ffm_pad = _round_up(ffm_dim, 128)

    # ---------------- glue: embedding gathers (plain JAX) ----------------
    # TODO(synk): move this gather + pairwise product inside the kernel via scalar prefetch.
    idx = x + offsets[None, :]                               # (B, F)
    gathered = jnp.take(ffm_tables, idx, axis=1)             # (F, B, F, D)
    pairs = []
    for i in range(F - 1):
        for j in range(i + 1, F):
            pairs.append(gathered[j, :, i, :] * gathered[i, :, j, :])
    cross = jnp.stack(pairs, axis=1).reshape(B, ffm_dim)     # (B, P*D) f32

    lin = jnp.sum(jnp.take(lin_w, idx, axis=0), axis=1) + lin_b     # (B, 1) f32

    # ---------------- host-side BatchNorm folding (all in f32) ----------------
    def bn_fold(p):
        s = p["gamma"] * jax.lax.rsqrt(p["var"] + eps)
        t = p["beta"] - p["mean"] * s
        return s, t

    s0, t0 = bn_fold(params["bn"])            # BN over the cross term

    fused = []
    for li, layer in enumerate(params["mlp"]):
        W = layer["w"]                        # (in, h)
        b = layer["b"]                        # (h,)
        sl, tl = bn_fold(layer)               # output-side BN of this layer
        if li == 0:
            b = b + t0 @ W                    # fold the standalone input BN into layer 0
            W = s0[:, None] * W
        b = b * sl + tl
        W = W * sl[None, :]
        fused.append((W, b))

    w_out_vec = params["mlp_out_w"].reshape(-1)          # (h_last,)
    b_out_scalar = params["mlp_out_b"].reshape(())       # ()
    if not fused:                                         # MLP with no hidden layers
        b_out_scalar = b_out_scalar + jnp.dot(t0, w_out_vec)
        w_out_vec = s0 * w_out_vec

    # Fold the final scalar bias into the linear term (keeps the epilogue scalar-free).
    lin_full = lin[:, 0] + b_out_scalar                   # (B,)

    # ---------------- pad lane dims to 128 & cast streamed/matmul data to bf16 ----------
    in_pad = ffm_pad
    fused_padded = []
    for (W, b) in fused:
        out_dim = W.shape[1]
        out_pad = _round_up(out_dim, 128)
        Wp = jnp.zeros((in_pad, out_pad), jnp.float32).at[:W.shape[0], :out_dim].set(W)
        bp = jnp.zeros((1, out_pad), jnp.float32).at[0, :out_dim].set(b)
        fused_padded.append((Wp.astype(jnp.bfloat16), bp))
        in_pad = out_pad
    w_out_p = jnp.zeros((1, in_pad), jnp.float32).at[0, :w_out_vec.shape[0]].set(w_out_vec)

    # ---------------- batch tiling (bounded padding waste) ----------------
    B8 = _round_up(B, 8)
    num_tiles = -(-B8 // batch_tile)                      # ceil
    TB = _round_up(-(-B8 // num_tiles), 8)
    B_pad = num_tiles * TB

    cross_p = (jnp.zeros((B_pad, ffm_pad), jnp.float32)
               .at[:B, :ffm_dim].set(cross)
               .astype(jnp.bfloat16))                     # streamed input (bf16)
    lin_p = (jnp.zeros((B_pad,), jnp.float32)
             .at[:B].set(lin_full)
             .reshape(num_tiles, 1, TB))                  # lane-dense linear term

    # ---------------- pallas_call ----------------
    kernel_inputs = [cross_p, lin_p]
    in_specs = [
        pl.BlockSpec((TB, ffm_pad), lambda i: (i, 0)),        # streamed activations
        pl.BlockSpec((1, 1, TB), lambda i: (i, 0, 0)),        # lane-dense linear term
    ]
    for (W, b) in fused_padded:                               # VMEM-resident weights
        kernel_inputs += [W, b]
        in_specs += [_resident_spec(W.shape), _resident_spec(b.shape)]
    kernel_inputs += [w_out_p]
    in_specs += [_resident_spec(w_out_p.shape)]

    kernel = _make_fnfm_kernel(len(fused_padded))
    out = pl.pallas_call(
        kernel,
        grid=(num_tiles,),
        in_specs=in_specs,
        out_specs=pl.BlockSpec((1, 1, TB), lambda i: (i, 0, 0)),
        out_shape=jax.ShapeDtypeStruct((num_tiles, 1, TB), jnp.float32),
        compiler_params=pltpu.CompilerParams(
            dimension_semantics=("parallel",),
            vmem_limit_bytes=48 * 1024 * 1024),
    )(*kernel_inputs)

    return out.reshape(B_pad)[:B]                             # (B,)


# ---------------------------------------------------------------------------
# Parameter init + pure-JAX reference (unfused, f32), mirroring the PyTorch module.
# ---------------------------------------------------------------------------
def init_params(key, field_dims, embed_dim, mlp_dims):
    F = len(field_dims)
    num_emb = int(sum(field_dims))
    ffm_dim = F * (F - 1) // 2 * embed_dim

    fd = jnp.asarray(field_dims, dtype=jnp.int32)
    offsets = jnp.concatenate([jnp.zeros((1,), jnp.int32), jnp.cumsum(fd)[:-1]])

    keys = iter(jax.random.split(key, 64))
    nxt = lambda: next(keys)

    # FeaturesLinear: Embedding(num_emb, 1) + zero bias
    linear_w = jax.random.normal(nxt(), (num_emb, 1), jnp.float32) * 0.01
    linear_b = jnp.zeros((1, 1), jnp.float32)

    # FieldAwareFactorizationMachine: F xavier-uniform tables
    bound = (6.0 / (num_emb + embed_dim)) ** 0.5
    ffm_embeddings = jax.random.uniform(
        nxt(), (F, num_emb, embed_dim), jnp.float32, -bound, bound)

    def bn_params(dim):
        return {
            "gamma": jax.random.uniform(nxt(), (dim,), jnp.float32, 0.5, 1.5),
            "beta": jax.random.normal(nxt(), (dim,), jnp.float32) * 0.1,
            "mean": jax.random.normal(nxt(), (dim,), jnp.float32) * 0.1,
            "var": jax.random.uniform(nxt(), (dim,), jnp.float32, 0.5, 1.5),
        }

    bn = bn_params(ffm_dim)

    mlp = []
    in_dim = ffm_dim
    for h in mlp_dims:
        lim = 1.0 / (in_dim ** 0.5)
        layer = {
            "w": jax.random.uniform(nxt(), (in_dim, h), jnp.float32, -lim, lim),
            "b": jax.random.uniform(nxt(), (h,), jnp.float32, -lim, lim),
        }
        layer.update(bn_params(h))
        mlp.append(layer)
        in_dim = h

    lim = 1.0 / (in_dim ** 0.5)
    mlp_out_w = jax.random.uniform(nxt(), (in_dim, 1), jnp.float32, -lim, lim)
    mlp_out_b = jax.random.uniform(nxt(), (1,), jnp.float32, -lim, lim)

    return {
        "offsets": offsets,
        "linear_w": linear_w, "linear_b": linear_b,
        "ffm_embeddings": ffm_embeddings,
        "bn": bn,
        "mlp": mlp,
        "mlp_out_w": mlp_out_w, "mlp_out_b": mlp_out_b,
    }


def _reference_forward(x, params, *, eps=1e-5):
    offsets = params["offsets"]
    B, F = x.shape
    idx = x + offsets[None, :]
    gathered = jnp.take(params["ffm_embeddings"], idx, axis=1)   # (F, B, F, D)
    pairs = []
    for i in range(F - 1):
        for j in range(i + 1, F):
            pairs.append(gathered[j, :, i, :] * gathered[i, :, j, :])
    cross = jnp.stack(pairs, axis=1).reshape(B, -1)

    bn = params["bn"]
    cross = (cross - bn["mean"]) / jnp.sqrt(bn["var"] + eps) * bn["gamma"] + bn["beta"]

    h = cross
    for layer in params["mlp"]:
        h = h @ layer["w"] + layer["b"]
        h = (h - layer["mean"]) / jnp.sqrt(layer["var"] + eps) * layer["gamma"] + layer["beta"]
        h = jnp.maximum(h, 0.0)
    mlp_out = h @ params["mlp_out_w"] + params["mlp_out_b"]                # (B, 1)

    lin = jnp.sum(jnp.take(params["linear_w"], idx, axis=0), axis=1) + params["linear_b"]
    return jax.nn.sigmoid(lin + mlp_out)[:, 0]


if __name__ == "__main__":
    # Small FNFM config: 3 fields, embed_dim=16 -> ffm_output_dim = 3*16 = 48.
    field_dims = (10, 20, 30)
    embed_dim = 16
    mlp_dims = (64, 32)
    batch = 8

    key = jax.random.PRNGKey(0)
    kp, kx = jax.random.split(key)
    params = init_params(kp, field_dims, embed_dim, mlp_dims)

    kxs = jax.random.split(kx, len(field_dims))
    x = jnp.stack(
        [jax.random.randint(kk, (batch,), 0, dim, dtype=jnp.int32)
         for dim, kk in zip(field_dims, kxs)],
        axis=1)                                            # (batch, num_fields) int32

    out = jax.block_until_ready(fnfm_forward(x, params))
    ref = _reference_forward(x, params)

    assert out.shape == (batch,)
    # bf16 streaming/matmul inputs with f32 accumulation -> loosened tolerance.
    assert jnp.allclose(out, ref, atol=1e-2, rtol=1e-2), (out, ref)
    print("KERNEL_OK")
</pallas_src>

<mosaic_0001>
module attributes {stable_mosaic.version = 11 : i64} {
  func.func @kernel(%arg0: i32, %arg1: memref<8x128xbf16, #tpu.memory_space<vmem>>, %arg2: memref<1x1x8xf32, #tpu.memory_space<vmem>>, %arg3: memref<128x128xbf16, #tpu.memory_space<vmem>>, %arg4: memref<1x128xf32, #tpu.memory_space<vmem>>, %arg5: memref<128x128xbf16, #tpu.memory_space<vmem>>, %arg6: memref<1x128xf32, #tpu.memory_space<vmem>>, %arg7: memref<1x128xf32, #tpu.memory_space<vmem>>, %arg8: memref<1x1x8xf32, #tpu.memory_space<vmem>>) attributes {dimension_semantics = [#tpu.dimension_semantics<parallel>], iteration_bounds = array<i64: 1>, scalar_prefetch = 0 : i64, scratch_operands = 0 : i64, tpu.core_type = #tpu.core_type<tc>, window_params = [{transform_indices = @transform_0, window_bounds = array<i64: 8, 128>}, {transform_indices = @transform_1, window_bounds = array<i64: 1, 1, 8>}, {pipeline_mode = #tpu.pipeline_mode<synchronous>, transform_indices = @transform_2, window_bounds = array<i64: 128, 128>}, {pipeline_mode = #tpu.pipeline_mode<synchronous>, transform_indices = @transform_3, window_bounds = array<i64: 1, 128>}, {pipeline_mode = #tpu.pipeline_mode<synchronous>, transform_indices = @transform_4, window_bounds = array<i64: 128, 128>}, {pipeline_mode = #tpu.pipeline_mode<synchronous>, transform_indices = @transform_5, window_bounds = array<i64: 1, 128>}, {pipeline_mode = #tpu.pipeline_mode<synchronous>, transform_indices = @transform_6, window_bounds = array<i64: 1, 128>}, {transform_indices = @transform_7, window_bounds = array<i64: 1, 1, 8>}]} {
    %c0 = arith.constant 0 : index
    %c0_0 = arith.constant 0 : index
    %0 = vector.load %arg1[%c0, %c0_0] : memref<8x128xbf16, #tpu.memory_space<vmem>>, vector<8x128xbf16>
    %c0_1 = arith.constant 0 : index
    %c0_2 = arith.constant 0 : index
    %c0_3 = arith.constant 0 : index
    %1 = vector.load %arg2[%c0_1, %c0_2, %c0_3] : memref<1x1x8xf32, #tpu.memory_space<vmem>>, vector<1x1x8xf32>
    %2 = vector.shape_cast %1 : vector<1x1x8xf32> to vector<1x8xf32>
    %c0_4 = arith.constant 0 : index
    %c0_5 = arith.constant 0 : index
    %3 = vector.load %arg3[%c0_4, %c0_5] : memref<128x128xbf16, #tpu.memory_space<vmem>>, vector<128x128xbf16>
    %c0_6 = arith.constant 0 : index
    %c0_7 = arith.constant 0 : index
    %4 = vector.load %arg4[%c0_6, %c0_7] : memref<1x128xf32, #tpu.memory_space<vmem>>, vector<1x128xf32>
    %cst = arith.constant dense<0.000000e+00> : vector<8x128xf32>
    %5 = tpu.matmul %0, %3, %cst {dimension_numbers = #tpu.dot_dimension_numbers<[1], [0], [0], [1], [0, 0, 1, 1], [], []>} : vector<8x128xbf16>, vector<128x128xbf16>, vector<8x128xf32> -> vector<8x128xf32>
    %6 = vector.broadcast %4 : vector<1x128xf32> to vector<8x128xf32>
    %7 = arith.addf %5, %6 : vector<8x128xf32>
    %cst_8 = arith.constant 0.000000e+00 : f32
    %8 = vector.broadcast %cst_8 : f32 to vector<8x128xf32>
    %9 = arith.maximumf %7, %8 : vector<8x128xf32>
    %10 = arith.truncf %9 : vector<8x128xf32> to vector<8x128xbf16>
    %c0_9 = arith.constant 0 : index
    %c0_10 = arith.constant 0 : index
    %11 = vector.load %arg5[%c0_9, %c0_10] : memref<128x128xbf16, #tpu.memory_space<vmem>>, vector<128x128xbf16>
    %c0_11 = arith.constant 0 : index
    %c0_12 = arith.constant 0 : index
    %12 = vector.load %arg6[%c0_11, %c0_12] : memref<1x128xf32, #tpu.memory_space<vmem>>, vector<1x128xf32>
    %cst_13 = arith.constant dense<0.000000e+00> : vector<8x128xf32>
    %13 = tpu.matmul %10, %11, %cst_13 {dimension_numbers = #tpu.dot_dimension_numbers<[1], [0], [0], [1], [0, 0, 1, 1], [], []>} : vector<8x128xbf16>, vector<128x128xbf16>, vector<8x128xf32> -> vector<8x128xf32>
    %14 = vector.broadcast %12 : vector<1x128xf32> to vector<8x128xf32>
    %15 = arith.addf %13, %14 : vector<8x128xf32>
    %cst_14 = arith.constant 0.000000e+00 : f32
    %16 = vector.broadcast %cst_14 : f32 to vector<8x128xf32>
    %17 = arith.maximumf %15, %16 : vector<8x128xf32>
    %18 = arith.truncf %17 : vector<8x128xf32> to vector<8x128xbf16>
    %c0_15 = arith.constant 0 : index
    %c0_16 = arith.constant 0 : index
    %19 = vector.load %arg7[%c0_15, %c0_16] : memref<1x128xf32, #tpu.memory_space<vmem>>, vector<1x128xf32>
    %20 = arith.extf %18 : vector<8x128xbf16> to vector<8x128xf32>
    %21 = vector.broadcast %19 : vector<1x128xf32> to vector<8x128xf32>
    %22 = arith.mulf %20, %21 : vector<8x128xf32>
    %cst_17 = arith.constant dense<0.000000e+00> : vector<8xf32>
    %23 = vector.multi_reduction <add>, %22, %cst_17 [1] : vector<8x128xf32> to vector<8xf32>
    %24 = vector.shape_cast %23 : vector<8xf32> to vector<8x1xf32>
    %25 = vector.shape_cast %24 : vector<8x1xf32> to vector<1x8xf32>
    %26 = arith.addf %25, %2 : vector<1x8xf32>
    %27 = arith.negf %26 : vector<1x8xf32>
    %28 = math.exp %27 : vector<1x8xf32>
    %cst_18 = arith.constant 1.000000e+00 : f32
    %29 = vector.broadcast %cst_18 : f32 to vector<1x8xf32>
    %30 = arith.addf %29, %28 : vector<1x8xf32>
    %31 = arith.divf %29, %30 : vector<1x8xf32>
    %32 = vector.shape_cast %31 : vector<1x8xf32> to vector<1x1x8xf32>
    %c0_19 = arith.constant 0 : index
    %c0_20 = arith.constant 0 : index
    %c0_21 = arith.constant 0 : index
    %33 = vector.load %arg8[%c0_19, %c0_20, %c0_21] : memref<1x1x8xf32, #tpu.memory_space<vmem>>, vector<1x1x8xf32>
    tpu.vector_store %arg8[%c0_19, %c0_20, %c0_21], %32 {strides = array<i32>} : memref<1x1x8xf32, #tpu.memory_space<vmem>>, vector<1x1x8xf32>,
    return
  }
  func.func @transform_0(%arg0: i32) -> (i32, i32) {
    %c0_i32 = arith.constant 0 : i32
    %c0_i32_0 = arith.constant 0 : i32
    return %arg0, %c0_i32 : i32, i32
  }
  func.func @transform_1(%arg0: i32) -> (i32, i32, i32) {
    %c0_i32 = arith.constant 0 : i32
    %c0_i32_0 = arith.constant 0 : i32
    %c0_i32_1 = arith.constant 0 : i32
    return %arg0, %c0_i32, %c0_i32_0 : i32, i32, i32
  }
  func.func @transform_2(%arg0: i32) -> (i32, i32) {
    %c0_i32 = arith.constant 0 : i32
    %c0_i32_0 = arith.constant 0 : i32
    %c0_i32_1 = arith.constant 0 : i32
    return %c0_i32, %c0_i32_0 : i32, i32
  }
  func.func @transform_3(%arg0: i32) -> (i32, i32) {
    %c0_i32 = arith.constant 0 : i32
    %c0_i32_0 = arith.constant 0 : i32
    %c0_i32_1 = arith.constant 0 : i32
    return %c0_i32, %c0_i32_0 : i32, i32
  }
  func.func @transform_4(%arg0: i32) -> (i32, i32) {
    %c0_i32 = arith.constant 0 : i32
    %c0_i32_0 = arith.constant 0 : i32
    %c0_i32_1 = arith.constant 0 : i32
    return %c0_i32, %c0_i32_0 : i32, i32
  }
  func.func @transform_5(%arg0: i32) -> (i32, i32) {
    %c0_i32 = arith.constant 0 : i32
    %c0_i32_0 = arith.constant 0 : i32
    %c0_i32_1 = arith.constant 0 : i32
    return %c0_i32, %c0_i32_0 : i32, i32
  }
  func.func @transform_6(%arg0: i32) -> (i32, i32) {
    %c0_i32 = arith.constant 0 : i32
    %c0_i32_0 = arith.constant 0 : i32
    %c0_i32_1 = arith.constant 0 : i32
    return %c0_i32, %c0_i32_0 : i32, i32
  }
  func.func @transform_7(%arg0: i32) -> (i32, i32, i32) {
    %c0_i32 = arith.constant 0 : i32
    %c0_i32_0 = arith.constant 0 : i32
    %c0_i32_1 = arith.constant 0 : i32
    return %arg0, %c0_i32, %c0_i32_0 : i32, i32, i32
  }
}

</mosaic_0001>

<llo_original>
// kernel: tpu_custom_call.1
$region0: #{tpu_custom_call.1}
  #allocation0 [shape = 'u32[]', space=smem, size = 0x4, offset = 0x4, fixed_abs, tag = 'smem constant byte address 0x4 - core index']
  #allocation1 [shape = 'u32[144,128]{1,0:T(1,128)}', space=vmem, size = 0x12000, scoped, tag = 'internal scratch']
  %s0 = inlined_call_operand.hbm [shape: bf16[8,128], index: 0, kind: input, shape index: {}]
  %s1 = inlined_call_operand.vmem [shape: f32[1,1,8], index: 1, kind: input, shape index: {}]
  %s2 = inlined_call_operand.hbm [shape: bf16[128,128], index: 2, kind: input, shape index: {}]
  %s3 = inlined_call_operand.vmem [shape: f32[1,128], index: 3, kind: input, shape index: {}]
  %s4 = inlined_call_operand.hbm [shape: bf16[128,128], index: 4, kind: input, shape index: {}]
  %s5 = inlined_call_operand.vmem [shape: f32[1,128], index: 5, kind: input, shape index: {}]
  %s6 = inlined_call_operand.vmem [shape: f32[1,128], index: 6, kind: input, shape index: {}]
  %s7 = inlined_call_operand.hbm [shape: f32[1,1,8], index: 7, kind: output, shape index: {}]
  %s8 = sld [smem:[#allocation0]]
  $region50: #{tpu_custom_call.1} parent=0
    _
  %s10 = ssub.s32 1, %s8
  %s11 = scalar_select 0, %s10, %s8
  $region1: #{tpu_custom_call.1} parent=0
    #allocation2 [shape = 'u8[2048]{0}', space=vmem, size = 0x800, scoped, tag = 'input window, operand 0, single buffered']
    #allocation3 [shape = 's32[1]{0}', space=sflag, size = 0x4, scoped, tag = 'scoped memory for tpu_custom_call.1']
    #allocation4 [shape = 's32[1]{0}', space=sflag, size = 0x4, scoped, tag = 'scoped memory for tpu_custom_call.1']
    #allocation5 [shape = 'u8[32768]{0}', space=vmem, size = 0x8000, scoped, tag = 'input window, operand 2, single buffered']
    #allocation6 [shape = 's32[1]{0}', space=sflag, size = 0x4, scoped, tag = 'scoped memory for tpu_custom_call.1']
    #allocation7 [shape = 'u8[32768]{0}', space=vmem, size = 0x8000, scoped, tag = 'input window, operand 4, single buffered']
    #allocation8 [shape = 'u8[512]{0}', space=vmem, size = 0x400, scoped, tag = 'output window, operand 0, single buffered']
    %12 = vsyncpa [#allocation3], 0
    %13 = vsyncpa [#allocation6], 0
    %14 = vsyncpa [#allocation4], 0
    // Predicated region
    $region2: #{tpu_custom_call.1} parent=1 // pred_check
      _
    $region3: #{tpu_custom_call.1} parent=1 // pred_check_branch
      %16 = sbr.rel (0) target = $region5
    $region4: #{tpu_custom_call.1} parent=1 // pred_region
      %s18 = ssub.s32 64, 64
      %19 = vsyncadd [#allocation3], %s18
      %s21 = sshll.u32 [#allocation2], 4
      %s22 = int_to_ptr.vmem [resolvable:$true] %s21
      %24 = dma.hbm_to_vmem [thread:$0]  %s0, 64, %s22, [#allocation3]
    $region5: #{tpu_custom_call.1} parent=1 // pred_fallthru
      _
    // Predicated region
    $region6: #{tpu_custom_call.1} parent=1 // pred_check
      _
    $region7: #{tpu_custom_call.1} parent=1 // pred_check_branch
      %26 = sbr.rel (0) target = $region9
    $region8: #{tpu_custom_call.1} parent=1 // pred_region
      _
    $region9: #{tpu_custom_call.1} parent=1 // pred_fallthru
      _
    // Predicated region
    $region10: #{tpu_custom_call.1} parent=1 // pred_check
      _
    $region11: #{tpu_custom_call.1} parent=1 // pred_check_branch
      %28 = sbr.rel (0) target = $region13
    $region12: #{tpu_custom_call.1} parent=1 // pred_region
      %s30 = ssub.s32 1024, 1024
      %31 = vsyncadd [#allocation6], %s30
      %s32 = sshll.u32 [#allocation5], 4
      %s33 = int_to_ptr.vmem [resolvable:$true] %s32
      %38 = dma.hbm_to_vmem [thread:$0]  %s2, 1024, %s33, [#allocation6], 64, 64, 4
    $region13: #{tpu_custom_call.1} parent=1 // pred_fallthru
      _
    // Predicated region
    $region14: #{tpu_custom_call.1} parent=1 // pred_check
      _
    $region15: #{tpu_custom_call.1} parent=1 // pred_check_branch
      %40 = sbr.rel (0) target = $region17
    $region16: #{tpu_custom_call.1} parent=1 // pred_region
      _
    $region17: #{tpu_custom_call.1} parent=1 // pred_fallthru
      _
    // Predicated region
    $region18: #{tpu_custom_call.1} parent=1 // pred_check
      _
    $region19: #{tpu_custom_call.1} parent=1 // pred_check_branch
      %42 = sbr.rel (0) target = $region21
    $region20: #{tpu_custom_call.1} parent=1 // pred_region
      %s44 = ssub.s32 1024, 1024
      %45 = vsyncadd [#allocation6], %s44
      %s46 = sshll.u32 [#allocation7], 4
      %s47 = int_to_ptr.vmem [resolvable:$true] %s46
      %52 = dma.hbm_to_vmem [thread:$0]  %s4, 1024, %s47, [#allocation6], 64, 64, 4
    $region21: #{tpu_custom_call.1} parent=1 // pred_fallthru
      _
    // Predicated region
    $region22: #{tpu_custom_call.1} parent=1 // pred_check
      _
    $region23: #{tpu_custom_call.1} parent=1 // pred_check_branch
      %54 = sbr.rel (0) target = $region25
    $region24: #{tpu_custom_call.1} parent=1 // pred_region
      _
    $region25: #{tpu_custom_call.1} parent=1 // pred_fallthru
      _
    // Predicated region
    $region26: #{tpu_custom_call.1} parent=1 // pred_check
      _
    $region27: #{tpu_custom_call.1} parent=1 // pred_check_branch
      %56 = sbr.rel (0) target = $region29
    $region28: #{tpu_custom_call.1} parent=1 // pred_region
      _
    $region29: #{tpu_custom_call.1} parent=1 // pred_fallthru
      _
    // Predicated region
    $region30: #{tpu_custom_call.1} parent=1 // pred_check
      _
    $region31: #{tpu_custom_call.1} parent=1 // pred_check_branch
      %58 = sbr.rel (0) target = $region33
    $region32: #{tpu_custom_call.1} parent=1 // pred_region
      %59 = dma.done [#allocation3], 64
    $region33: #{tpu_custom_call.1} parent=1 // pred_fallthru
      _
    // Predicated region
    $region34: #{tpu_custom_call.1} parent=1 // pred_check
      _
    $region35: #{tpu_custom_call.1} parent=1 // pred_check_branch
      %61 = sbr.rel (0) target = $region37
    $region36: #{tpu_custom_call.1} parent=1 // pred_region
      %62 = dma.done [#allocation6], 1024
    $region37: #{tpu_custom_call.1} parent=1 // pred_fallthru
      _
    // Predicated region
    $region38: #{tpu_custom_call.1} parent=1 // pred_check
      _
    $region39: #{tpu_custom_call.1} parent=1 // pred_check_branch
      %64 = sbr.rel (0) target = $region41
    $region40: #{tpu_custom_call.1} parent=1 // pred_region
      %65 = dma.done [#allocation6], 1024
    $region41: #{tpu_custom_call.1} parent=1 // pred_fallthru
      _
    %v67 = vld [vmem:[#allocation2] sm:$0xf]
    %v68 = vld [vmem:[%s1] sm:$0x1]
    %v69 = vld [vmem:[#allocation5] sm:$0xf]
    %v70 = vld [vmem:[#allocation5 + $0x4] sm:$0xf]
    %v71 = vld [vmem:[#allocation5 + $0x8] sm:$0xf]
    %v72 = vld [vmem:[#allocation5 + $0xc] sm:$0xf]
    %v73 = vld [vmem:[#allocation5 + $0x10] sm:$0xf]
    %v74 = vld [vmem:[#allocation5 + $0x14] sm:$0xf]
    %v75 = vld [vmem:[#allocation5 + $0x18] sm:$0xf]
    %v76 = vld [vmem:[#allocation5 + $0x1c] sm:$0xf]
    %v77 = vld [vmem:[#allocation5 + $0x20] sm:$0xf]
    %v78 = vld [vmem:[#allocation5 + $0x24] sm:$0xf]
    %v79 = vld [vmem:[#allocation5 + $0x28] sm:$0xf]
    %v80 = vld [vmem:[#allocation5 + $0x2c] sm:$0xf]
    %v81 = vld [vmem:[#allocation5 + $0x30] sm:$0xf]
    %v82 = vld [vmem:[#allocation5 + $0x34] sm:$0xf]
    %v83 = vld [vmem:[#allocation5 + $0x38] sm:$0xf]
    %v84 = vld [vmem:[#allocation5 + $0x3c] sm:$0xf]
    %v85 = vld [vmem:[%s3] sm:$0x1]
    %v87 = vlaneseq
    %v88 = vshrl.u32 %v87, 7
    %v89 = vsub.s32 0, %v88
    %v90 = vrot.slane %v85, %v89
    %v108 = vunpack.c.l.b16 %v69
    %v109 = vunpack.c.l.b16 %v70
    %v110 = vunpack.c.l.b16 %v71
    %v111 = vunpack.c.l.b16 %v72
    %v112 = vunpack.c.l.b16 %v73
    %v113 = vunpack.c.l.b16 %v74
    %v114 = vunpack.c.l.b16 %v75
    %v115 = vunpack.c.l.b16 %v76
    %v116 = vunpack.c.l.b16 %v77
    %v117 = vunpack.c.l.b16 %v78
    %v118 = vunpack.c.l.b16 %v79
    %v119 = vunpack.c.l.b16 %v80
    %v120 = vunpack.c.l.b16 %v81
    %v121 = vunpack.c.l.b16 %v82
    %v122 = vunpack.c.l.b16 %v83
    %v123 = vunpack.c.l.b16 %v84
    %v124 = vpack.c.b16 %v109, %v108
    %v125 = vpack.c.b16 %v111, %v110
    %v126 = vpack.c.b16 %v113, %v112
    %v127 = vpack.c.b16 %v115, %v114
    %v128 = vpack.c.b16 %v117, %v116
    %v129 = vpack.c.b16 %v119, %v118
    %v130 = vpack.c.b16 %v121, %v120
    %v131 = vpack.c.b16 %v123, %v122
    %140 = vmatprep.subr.bf16.mxu0 0
    %141 = vmatpush1.bf16.msra.mxu0 %v124
    %142 = vmatprep.subr.bf16.mxu0 0
    %143 = vmatpush1.bf16.msra.mxu0 %v125
    %144 = vmatprep.subr.bf16.mxu0 0
    %145 = vmatpush1.bf16.msra.mxu0 %v126
    %146 = vmatprep.subr.bf16.mxu0 0
    %147 = vmatpush1.bf16.msra.mxu0 %v127
    %148 = vmatprep.subr.bf16.mxu0 0
    %149 = vmatpush1.bf16.msra.mxu0 %v128
    %150 = vmatprep.subr.bf16.mxu0 0
    %151 = vmatpush1.bf16.msra.mxu0 %v129
    %152 = vmatprep.subr.bf16.mxu0 0
    %153 = vmatpush1.bf16.msra.mxu0 %v130
    %154 = vmatprep.subr.bf16.mxu0 0
    %155 = vmatpush1.bf16.msra.mxu0 %v131
    %156 = vmatprep.subr.bf16.mxu0 0
    %157 = vmatpush1.bf16.msra.mxu0 0
    %158 = vmatprep.subr.bf16.mxu0 0
    %159 = vmatpush1.bf16.msra.mxu0 0
    %160 = vmatprep.subr.bf16.mxu0 0
    %161 = vmatpush1.bf16.msra.mxu0 0
    %162 = vmatprep.subr.bf16.mxu0 0
    %163 = vmatpush1.bf16.msra.mxu0 0
    %164 = vmatprep.subr.bf16.mxu0 0
    %165 = vmatpush1.bf16.msra.mxu0 0
    %166 = vmatprep.subr.bf16.mxu0 0
    %167 = vmatpush1.bf16.msra.mxu0 0
    %168 = vmatprep.subr.bf16.mxu0 0
    %169 = vmatpush1.bf16.msra.mxu0 0
    %170 = vmatprep.subr.bf16.mxu0 0
    %171 = vmatpush1.bf16.msra.mxu0 0
    %172 = vmatprep.mubr.bf16.mxu0 0
    %173 = vmatmul.mubr.bf16.gmra.mrb[0].mxu0 %v67
    %v174 = vpop.f32.mrb[0].mxu0
    %v175 = vadd.f32 %v90, %v174
    %v176 = vpop.f32.mrb[0].mxu0
    %v177 = vpop.f32.mrb[0].mxu0
    %v178 = vpop.f32.mrb[0].mxu0
    %179 = vdwg.mxu0
    %v180 = vmax.f32 %v175, 0.0
    %v181 = vpack.c.bf16 %v180, %v180
    %v182 = vld [vmem:[#allocation7] sm:$0xf]
    %v183 = vld [vmem:[#allocation7 + $0x4] sm:$0xf]
    %v184 = vld [vmem:[#allocation7 + $0x8] sm:$0xf]
    %v185 = vld [vmem:[#allocation7 + $0xc] sm:$0xf]
    %v186 = vld [vmem:[#allocation7 + $0x10] sm:$0xf]
    %v187 = vld [vmem:[#allocation7 + $0x14] sm:$0xf]
    %v188 = vld [vmem:[#allocation7 + $0x18] sm:$0xf]
    %v189 = vld [vmem:[#allocation7 + $0x1c] sm:$0xf]
    %v190 = vld [vmem:[#allocation7 + $0x20] sm:$0xf]
    %v191 = vld [vmem:[#allocation7 + $0x24] sm:$0xf]
    %v192 = vld [vmem:[#allocation7 + $0x28] sm:$0xf]
    %v193 = vld [vmem:[#allocation7 + $0x2c] sm:$0xf]
    %v194 = vld [vmem:[#allocation7 + $0x30] sm:$0xf]
    %v195 = vld [vmem:[#allocation7 + $0x34] sm:$0xf]
    %v196 = vld [vmem:[#allocation7 + $0x38] sm:$0xf]
    %v197 = vld [vmem:[#allocation7 + $0x3c] sm:$0xf]
    %v198 = vld [vmem:[%s5] sm:$0x1]
    %v200 = vlaneseq
    %v201 = vshrl.u32 %v200, 7
    %v202 = vsub.s32 0, %v201
    %v203 = vrot.slane %v198, %v202
    %v221 = vunpack.c.l.b16 %v182
    %v222 = vunpack.c.l.b16 %v183
    %v223 = vunpack.c.l.b16 %v184
    %v224 = vunpack.c.l.b16 %v185
    %v225 = vunpack.c.l.b16 %v186
    %v226 = vunpack.c.l.b16 %v187
    %v227 = vunpack.c.l.b16 %v188
    %v228 = vunpack.c.l.b16 %v189
    %v229 = vunpack.c.l.b16 %v190
    %v230 = vunpack.c.l.b16 %v191
    %v231 = vunpack.c.l.b16 %v192
    %v232 = vunpack.c.l.b16 %v193
    %v233 = vunpack.c.l.b16 %v194
    %v234 = vunpack.c.l.b16 %v195
    %v235 = vunpack.c.l.b16 %v196
    %v236 = vunpack.c.l.b16 %v197
    %v237 = vpack.c.b16 %v222, %v221
    %v238 = vpack.c.b16 %v224, %v223
    %v239 = vpack.c.b16 %v226, %v225
    %v240 = vpack.c.b16 %v228, %v227
    %v241 = vpack.c.b16 %v230, %v229
    %v242 = vpack.c.b16 %v232, %v231
    %v243 = vpack.c.b16 %v234, %v233
    %v244 = vpack.c.b16 %v236, %v235
    %253 = vmatprep.subr.bf16.mxu0 0
    %254 = vmatpush1.bf16.msra.mxu0 %v237
    %255 = vmatprep.subr.bf16.mxu0 0
    %256 = vmatpush1.bf16.msra.mxu0 %v238
    %257 = vmatprep.subr.bf16.mxu0 0
    %258 = vmatpush1.bf16.msra.mxu0 %v239
    %259 = vmatprep.subr.bf16.mxu0 0
    %260 = vmatpush1.bf16.msra.mxu0 %v240
    %261 = vmatprep.subr.bf16.mxu0 0
    %262 = vmatpush1.bf16.msra.mxu0 %v241
    %263 = vmatprep.subr.bf16.mxu0 0
    %264 = vmatpush1.bf16.msra.mxu0 %v242
    %265 = vmatprep.subr.bf16.mxu0 0
    %266 = vmatpush1.bf16.msra.mxu0 %v243
    %267 = vmatprep.subr.bf16.mxu0 0
    %268 = vmatpush1.bf16.msra.mxu0 %v244
    %269 = vmatprep.subr.bf16.mxu0 0
    %270 = vmatpush1.bf16.msra.mxu0 0
    %271 = vmatprep.subr.bf16.mxu0 0
    %272 = vmatpush1.bf16.msra.mxu0 0
    %273 = vmatprep.subr.bf16.mxu0 0
    %274 = vmatpush1.bf16.msra.mxu0 0
    %275 = vmatprep.subr.bf16.mxu0 0
    %276 = vmatpush1.bf16.msra.mxu0 0
    %277 = vmatprep.subr.bf16.mxu0 0
    %278 = vmatpush1.bf16.msra.mxu0 0
    %279 = vmatprep.subr.bf16.mxu0 0
    %280 = vmatpush1.bf16.msra.mxu0 0
    %281 = vmatprep.subr.bf16.mxu0 0
    %282 = vmatpush1.bf16.msra.mxu0 0
    %283 = vmatprep.subr.bf16.mxu0 0
    %284 = vmatpush1.bf16.msra.mxu0 0
    %285 = vmatprep.mubr.bf16.mxu0 0
    %286 = vmatmul.mubr.bf16.gmra.mrb[0].mxu0 %v181
    %v287 = vpop.f32.mrb[0].mxu0
    %v288 = vadd.f32 %v203, %v287
    %v289 = vpop.f32.mrb[0].mxu0
    %v290 = vpop.f32.mrb[0].mxu0
    %v291 = vpop.f32.mrb[0].mxu0
    %292 = vdwg.mxu0
    %v293 = vmax.f32 %v288, 0.0
    %v294 = vpack.c.bf16 %v293, %v293
    %v295 = vld [vmem:[%s6] sm:$0x1]
    %v296 = vunpack.c.l.bf16 %v294
    %v298 = vlaneseq
    %v299 = vshrl.u32 %v298, 7
    %v300 = vsub.s32 0, %v299
    %v301 = vrot.slane %v295, %v300
    %v303 = vmul.f32 %v296, %v301
    %304 = vadd.xlane.f32.xlu0 %v303
    %v305 = vpop.xlane.xlu0 %304
    %v307 = vlaneseq
    %v308 = vshrl.u32 %v307, 7
    %v309 = vsub.s32 0, %v308
    %v310 = vrot.slane %v68, %v309
    %312 = vbcast.lane.b32.xlu0 %v310, 256
    %v313 = vpop.permute.xlu0 %312
    %v315 = vadd.f32 %v305, %v313
    %v316 = vxor.u32 %v315, 2147483648
    %v317 = vmul.f32 %v316, 1.442695
    %v318 = vpow.pop %v317
    %v319 = vadd.f32 %v318, 1.0
    %v320 = vrcp.pop %v319
    %v321 = vmul.f32 1.0, %v320
    %323 = vset.pattern.permute.xlu0 0
    %324 = vperm.xlu0 %323, %v321
    %v325 = vpop.permute.xlu0 %324
    %v326 = vlaneseq
    %v327 = vand.u32 %v326, 127
    %v328 = vlaneseq
    %v329 = vshrl.u32 %v328, 7
    %v330 = vsub.s32 %v327, %v329
    %v331 = vrot.slane %v325, %v330
    %vm333 = vcmask 57344
    %334 = vst.msk [vmem:[#allocation8] sm:$0x1] %vm333, %v331
    // Predicated region
    $region42: #{tpu_custom_call.1} parent=1 // pred_check
      _
    $region43: #{tpu_custom_call.1} parent=1 // pred_check_branch
      %336 = sbr.rel (0) target = $region45
    $region44: #{tpu_custom_call.1} parent=1 // pred_region
      %s338 = ssub.s32 16, 16
      %339 = vsyncadd [#allocation4], %s338
      %s341 = sshll.u32 [#allocation8], 4
      %s342 = int_to_ptr.vmem [resolvable:$true] %s341
      %344 = dma.vmem_to_hbm [thread:$0]  %s342, 16, %s7, [#allocation4]
    $region45: #{tpu_custom_call.1} parent=1 // pred_fallthru
      _
    // Predicated region
    $region46: #{tpu_custom_call.1} parent=1 // pred_check
      _
    $region47: #{tpu_custom_call.1} parent=1 // pred_check_branch
      %346 = sbr.rel (0) target = $region49
    $region48: #{tpu_custom_call.1} parent=1 // pred_region
      %347 = dma.done [#allocation4], 16
    $region49: #{tpu_custom_call.1} parent=1 // pred_fallthru
      _
    %348 = vsyncpa [#allocation3], 1
    %349 = vsyncpa [#allocation6], 1
    %350 = vsyncpa [#allocation4], 1

</llo_original>
